<compile_context>
chip_gen: v7x
topology: tpu7x:2x2x1
jax: 0.10.0
libtpu: 0.0.40
codegen_flags: <defaults>
</compile_context>

<pallas_src>
import jax
import jax.numpy as jnp
from jax import lax
from jax.experimental import pallas as pl
from jax.experimental.pallas import tpu as pltpu

IN_FEATURES = 8
OUT_FEATURES = 16
MAX_BATCH_TILE = 512  # rows per grid step for large batches (sweet spot per tile sweeps)


def linear_kernel(x_ref, w_ref, b_ref, o_ref):
    # x_ref: (TB, IN), w_ref: (OUT, IN), b_ref: (1, OUT), o_ref: (TB, OUT)
    # Contract x's dim 1 against w's dim 1 (i.e. x @ w.T) without a transpose:
    acc = lax.dot_general(
        x_ref[...], w_ref[...],
        dimension_numbers=(((1,), (1,)), ((), ())),
        preferred_element_type=jnp.float32,
    )
    o_ref[...] = (acc + b_ref[...]).astype(o_ref.dtype)


def _round_up(n, m):
    return ((n + m - 1) // m) * m


def linear_forward(x, weight, bias):
    """y = x @ weight.T + bias   (matches torch.nn.Linear(8, 16) semantics).

    x:      (B, IN_FEATURES)  float32
    weight: (OUT_FEATURES, IN_FEATURES) float32   (torch layout, NOT transposed)
    bias:   (OUT_FEATURES,) float32
    returns (B, OUT_FEATURES) float32
    """
    B = x.shape[0]

    # Batch tile: multiple of 8 (sublane), capped at MAX_BATCH_TILE.
    tb = min(MAX_BATCH_TILE, _round_up(B, 8))
    b_pad = _round_up(B, tb)
    if b_pad != B:
        x = jnp.pad(x, ((0, b_pad - B), (0, 0)))

    b2d = bias.reshape(1, OUT_FEATURES)  # 2-D for a clean lane layout

    y = pl.pallas_call(
        linear_kernel,
        out_shape=jax.ShapeDtypeStruct((b_pad, OUT_FEATURES), x.dtype),
        grid=(b_pad // tb,),
        in_specs=[
            pl.BlockSpec((tb, IN_FEATURES), lambda i: (i, 0)),
            pl.BlockSpec((OUT_FEATURES, IN_FEATURES), lambda i: (0, 0)),
            pl.BlockSpec((1, OUT_FEATURES), lambda i: (0, 0)),
        ],
        out_specs=pl.BlockSpec((tb, OUT_FEATURES), lambda i: (i, 0)),
        compiler_params=pltpu.CompilerParams(
            dimension_semantics=("parallel",),
        ),
    )(x, weight, b2d)

    if b_pad != B:
        y = y[:B]
    return y


if __name__ == "__main__":
    key = jax.random.PRNGKey(0)
    kx, kw, kb = jax.random.split(key, 3)

    # Deterministic parameter init (shapes from nn.Linear(8, 16)).
    bound = 1.0 / (IN_FEATURES ** 0.5)
    weight = jax.random.uniform(
        kw, (OUT_FEATURES, IN_FEATURES), jnp.float32, -bound, bound)
    bias = jax.random.uniform(
        kb, (OUT_FEATURES,), jnp.float32, -bound, bound)

    # Small batch of inputs: (batch=8, in_features=8).
    x = jax.random.normal(kx, (8, IN_FEATURES), jnp.float32)

    y = linear_forward(x, weight, bias)
    y = jax.block_until_ready(y)

    # Sanity check against plain-JAX reference.
    y_ref = x @ weight.T + bias
    assert y.shape == (8, OUT_FEATURES)
    assert jnp.allclose(y, y_ref, atol=1e-5, rtol=1e-5)

    # Also exercise a non-tile-multiple batch to check the padded-tail path.
    x2 = jax.random.normal(kx, (13, IN_FEATURES), jnp.float32)
    y2 = jax.block_until_ready(linear_forward(x2, weight, bias))
    assert jnp.allclose(y2, x2 @ weight.T + bias, atol=1e-5, rtol=1e-5)

    print("KERNEL_OK")
</pallas_src>

<mosaic_0001>
module attributes {stable_mosaic.version = 11 : i64} {
  func.func @linear_kernel(%arg0: i32, %arg1: memref<8x8xf32, #tpu.memory_space<vmem>>, %arg2: memref<16x8xf32, #tpu.memory_space<vmem>>, %arg3: memref<1x16xf32, #tpu.memory_space<vmem>>, %arg4: memref<8x16xf32, #tpu.memory_space<vmem>>) attributes {dimension_semantics = [#tpu.dimension_semantics<parallel>], iteration_bounds = array<i64: 1>, scalar_prefetch = 0 : i64, scratch_operands = 0 : i64, tpu.core_type = #tpu.core_type<tc>, window_params = [{transform_indices = @transform_0, window_bounds = array<i64: 8, 8>}, {pipeline_mode = #tpu.pipeline_mode<synchronous>, transform_indices = @transform_1, window_bounds = array<i64: 16, 8>}, {pipeline_mode = #tpu.pipeline_mode<synchronous>, transform_indices = @transform_2, window_bounds = array<i64: 1, 16>}, {transform_indices = @transform_3, window_bounds = array<i64: 8, 16>}]} {
    %c0 = arith.constant 0 : index
    %c0_0 = arith.constant 0 : index
    %0 = vector.load %arg1[%c0, %c0_0] : memref<8x8xf32, #tpu.memory_space<vmem>>, vector<8x8xf32>
    %c0_1 = arith.constant 0 : index
    %c0_2 = arith.constant 0 : index
    %1 = vector.load %arg2[%c0_1, %c0_2] : memref<16x8xf32, #tpu.memory_space<vmem>>, vector<16x8xf32>
    %cst = arith.constant dense<0.000000e+00> : vector<8x16xf32>
    %2 = tpu.matmul %0, %1, %cst {dimension_numbers = #tpu.dot_dimension_numbers<[1], [1], [0], [0], [0, 0, 1, 0], [], []>} : vector<8x8xf32>, vector<16x8xf32>, vector<8x16xf32> -> vector<8x16xf32>
    %c0_3 = arith.constant 0 : index
    %c0_4 = arith.constant 0 : index
    %3 = vector.load %arg3[%c0_3, %c0_4] : memref<1x16xf32, #tpu.memory_space<vmem>>, vector<1x16xf32>
    %4 = vector.broadcast %3 : vector<1x16xf32> to vector<8x16xf32>
    %5 = arith.addf %2, %4 : vector<8x16xf32>
    %c0_5 = arith.constant 0 : index
    %c0_6 = arith.constant 0 : index
    %6 = vector.load %arg4[%c0_5, %c0_6] : memref<8x16xf32, #tpu.memory_space<vmem>>, vector<8x16xf32>
    tpu.vector_store %arg4[%c0_5, %c0_6], %5 {strides = array<i32>} : memref<8x16xf32, #tpu.memory_space<vmem>>, vector<8x16xf32>,
    return
  }
  func.func @transform_0(%arg0: i32) -> (i32, i32) {
    %c0_i32 = arith.constant 0 : i32
    %c0_i32_0 = arith.constant 0 : i32
    return %arg0, %c0_i32 : i32, i32
  }
  func.func @transform_1(%arg0: i32) -> (i32, i32) {
    %c0_i32 = arith.constant 0 : i32
    %c0_i32_0 = arith.constant 0 : i32
    %c0_i32_1 = arith.constant 0 : i32
    return %c0_i32, %c0_i32_0 : i32, i32
  }
  func.func @transform_2(%arg0: i32) -> (i32, i32) {
    %c0_i32 = arith.constant 0 : i32
    %c0_i32_0 = arith.constant 0 : i32
    %c0_i32_1 = arith.constant 0 : i32
    return %c0_i32, %c0_i32_0 : i32, i32
  }
  func.func @transform_3(%arg0: i32) -> (i32, i32) {
    %c0_i32 = arith.constant 0 : i32
    %c0_i32_0 = arith.constant 0 : i32
    return %arg0, %c0_i32 : i32, i32
  }
}

</mosaic_0001>

<llo_original>
// kernel: tpu_custom_call.1
$region0: #{tpu_custom_call.1}
  #allocation0 [shape = 'u32[]', space=smem, size = 0x4, offset = 0x4, fixed_abs, tag = 'smem constant byte address 0x4 - core index']
  #allocation1 [shape = 'u32[144,128]{1,0:T(1,128)}', space=vmem, size = 0x12000, scoped, tag = 'internal scratch']
  %s0 = inlined_call_operand.vmem [shape: f32[8,8], index: 0, kind: input, shape index: {}]
  %s1 = inlined_call_operand.vmem [shape: f32[16,8], index: 1, kind: input, shape index: {}]
  %s2 = inlined_call_operand.vmem [shape: f32[1,16], index: 2, kind: input, shape index: {}]
  %s3 = inlined_call_operand.hbm [shape: f32[8,16], index: 3, kind: output, shape index: {}]
  %s4 = sld [smem:[#allocation0]]
  $region22: #{tpu_custom_call.1} parent=0
    _
  %s6 = ssub.s32 1, %s4
  %s7 = scalar_select 0, %s6, %s4
  $region1: #{tpu_custom_call.1} parent=0
    #allocation2 [shape = 'u8[4096]{0}', space=vmem, size = 0x1000, scoped, tag = 'output window, operand 0, single buffered']
    #allocation3 [shape = 's32[1]{0}', space=sflag, size = 0x4, scoped, tag = 'scoped memory for tpu_custom_call.1']
    %8 = vsyncpa [#allocation3], 0
    // Predicated region
    $region2: #{tpu_custom_call.1} parent=1 // pred_check
      _
    $region3: #{tpu_custom_call.1} parent=1 // pred_check_branch
      %10 = sbr.rel (0) target = $region5
    $region4: #{tpu_custom_call.1} parent=1 // pred_region
      _
    $region5: #{tpu_custom_call.1} parent=1 // pred_fallthru
      _
    // Predicated region
    $region6: #{tpu_custom_call.1} parent=1 // pred_check
      _
    $region7: #{tpu_custom_call.1} parent=1 // pred_check_branch
      %12 = sbr.rel (0) target = $region9
    $region8: #{tpu_custom_call.1} parent=1 // pred_region
      _
    $region9: #{tpu_custom_call.1} parent=1 // pred_fallthru
      _
    // Predicated region
    $region10: #{tpu_custom_call.1} parent=1 // pred_check
      _
    $region11: #{tpu_custom_call.1} parent=1 // pred_check_branch
      %14 = sbr.rel (0) target = $region13
    $region12: #{tpu_custom_call.1} parent=1 // pred_region
      _
    $region13: #{tpu_custom_call.1} parent=1 // pred_fallthru
      _
    %v15 = vld [vmem:[%s0] sm:$0xff]
    %v16 = vld [vmem:[%s1] sm:$0xff]
    %v17 = vld [vmem:[%s1 + $0x8] sm:$0xff]
    %v18 = vld [vmem:[%s2] sm:$0x1]
    %v20 = vlaneseq
    %v21 = vshrl.u32 %v20, 7
    %v22 = vsub.s32 0, %v21
    %v23 = vrot.slane %v18, %v22
    %vm25 = vcmask 64512
    %v27 = vsel %vm25, %v15, 0
    %v30 = vsel %vm25, %v16, 0
    %v33 = vsel %vm25, %v17, 0
    %35 = vmatprep.subr.mxu0 0.0
    %36 = vmatpush1.xpose.msra.mxu0 %v30
    %37 = vmatprep.subr.mxu0 0.0
    %38 = vmatpush1.xpose.msra.mxu0 %v33
    %39 = vmatprep.subr.mxu0 0.0
    %40 = vmatpush1.xpose.msra.mxu0 0.0
    %41 = vmatprep.subr.mxu0 0.0
    %42 = vmatpush1.xpose.msra.mxu0 0.0
    %43 = vmatprep.subr.mxu0 0.0
    %44 = vmatpush1.xpose.msra.mxu0 0.0
    %45 = vmatprep.subr.mxu0 0.0
    %46 = vmatpush1.xpose.msra.mxu0 0.0
    %47 = vmatprep.subr.mxu0 0.0
    %48 = vmatpush1.xpose.msra.mxu0 0.0
    %49 = vmatprep.subr.mxu0 0.0
    %50 = vmatpush1.xpose.msra.mxu0 0.0
    %51 = vmatprep.subr.mxu0 0.0
    %52 = vmatpush1.xpose.msra.mxu0 0.0
    %53 = vmatprep.subr.mxu0 0.0
    %54 = vmatpush1.xpose.msra.mxu0 0.0
    %55 = vmatprep.subr.mxu0 0.0
    %56 = vmatpush1.xpose.msra.mxu0 0.0
    %57 = vmatprep.subr.mxu0 0.0
    %58 = vmatpush1.xpose.msra.mxu0 0.0
    %59 = vmatprep.subr.mxu0 0.0
    %60 = vmatpush1.xpose.msra.mxu0 0.0
    %61 = vmatprep.subr.mxu0 0.0
    %62 = vmatpush1.xpose.msra.mxu0 0.0
    %63 = vmatprep.subr.mxu0 0.0
    %64 = vmatpush1.xpose.msra.mxu0 0.0
    %65 = vmatprep.subr.mxu0 0.0
    %66 = vmatpush1.xpose.msra.mxu0 0.0
    %67 = vmatprep.subr.mxu0 0.0
    %68 = vmatpush1.xpose.msra.mxu0 0.0
    %69 = vmatprep.subr.mxu0 0.0
    %70 = vmatpush1.xpose.msra.mxu0 0.0
    %71 = vmatprep.subr.mxu0 0.0
    %72 = vmatpush1.xpose.msra.mxu0 0.0
    %73 = vmatprep.subr.mxu0 0.0
    %74 = vmatpush1.xpose.msra.mxu0 0.0
    %75 = vmatprep.subr.mxu0 0.0
    %76 = vmatpush1.xpose.msra.mxu0 0.0
    %77 = vmatprep.subr.mxu0 0.0
    %78 = vmatpush1.xpose.msra.mxu0 0.0
    %79 = vmatprep.subr.mxu0 0.0
    %80 = vmatpush1.xpose.msra.mxu0 0.0
    %81 = vmatprep.subr.mxu0 0.0
    %82 = vmatpush1.xpose.msra.mxu0 0.0
    %83 = vmatprep.subr.mxu0 0.0
    %84 = vmatpush1.xpose.msra.mxu0 0.0
    %85 = vmatprep.subr.mxu0 0.0
    %86 = vmatpush1.xpose.msra.mxu0 0.0
    %87 = vmatprep.subr.mxu0 0.0
    %88 = vmatpush1.xpose.msra.mxu0 0.0
    %89 = vmatprep.subr.mxu0 0.0
    %90 = vmatpush1.xpose.msra.mxu0 0.0
    %91 = vmatprep.subr.mxu0 0.0
    %92 = vmatpush1.xpose.msra.mxu0 0.0
    %93 = vmatprep.subr.mxu0 0.0
    %94 = vmatpush1.xpose.msra.mxu0 0.0
    %95 = vmatprep.subr.mxu0 0.0
    %96 = vmatpush1.xpose.msra.mxu0 0.0
    %97 = vmatprep.subr.mxu0 0.0
    %98 = vmatpush1.xpose.msra.mxu0 0.0
    %99 = vmatprep.mubr.f32.mxu0 0.0
    %100 = vmatmul.mubr.f32.gmra.mrb[0].mxu0 %v27
    %v101 = vpop.f32.mrb[0].mxu0
    %v102 = vadd.f32 %v23, %v101
    %v103 = vpop.f32.mrb[0].mxu0
    %104 = vdwg.mxu0
    %vm105 = vcmask 130048
    %106 = vst.msk [vmem:[#allocation2] sm:$0xff] %vm105, %v102
    // Predicated region
    $region14: #{tpu_custom_call.1} parent=1 // pred_check
      _
    $region15: #{tpu_custom_call.1} parent=1 // pred_check_branch
      %108 = sbr.rel (0) target = $region17
    $region16: #{tpu_custom_call.1} parent=1 // pred_region
      %s110 = ssub.s32 128, 128
      %111 = vsyncadd [#allocation3], %s110
      %s113 = sshll.u32 [#allocation2], 4
      %s114 = int_to_ptr.vmem [resolvable:$true] %s113
      %116 = dma.vmem_to_hbm [thread:$0]  %s114, 128, %s3, [#allocation3]
    $region17: #{tpu_custom_call.1} parent=1 // pred_fallthru
      _
    // Predicated region
    $region18: #{tpu_custom_call.1} parent=1 // pred_check
      _
    $region19: #{tpu_custom_call.1} parent=1 // pred_check_branch
      %118 = sbr.rel (0) target = $region21
    $region20: #{tpu_custom_call.1} parent=1 // pred_region
      %119 = dma.done [#allocation3], 128
    $region21: #{tpu_custom_call.1} parent=1 // pred_fallthru
      _
    %120 = vsyncpa [#allocation3], 1

</llo_original>
